<compile_context>
chip_gen: v7x
topology: tpu7x:2x2x1
jax: 0.10.0
libtpu: 0.0.40
codegen_flags: <defaults>
</compile_context>

<pallas_src>
import jax
import jax.numpy as jnp
from jax.experimental import pallas as pl
from jax.experimental.pallas import tpu as pltpu

NUM_BATCHES_CALIBRATION = 200  # kept for parity with the PyTorch module

TARGET_BLOCK_BYTES = 4 << 20   # ~4 MiB f32 blocks (perf-review sweep midpoint)
VMEM_LIMIT_BYTES = 32 * 1024 * 1024  # fits 4x 4 MiB double-buffered on all gens


def _make_quantizer_kernel(min_val: float, max_val: float):
    """Builds the elementwise fake-quant kernel with static clamp bounds."""

    def kernel(scale_ref, x_ref, o_ref):
        s = scale_ref[0]      # scalar scale from SMEM (registered buffer)
        inv = scale_ref[1]    # host-precomputed 1/scale (no per-step divide)
        q = jnp.round(x_ref[...] * inv)        # quantize + Round.apply fwd
        q = jnp.clip(q, min_val, max_val)      # clamp
        o_ref[...] = q * s                     # dequantize

    return kernel


def _choose_lane(total: int):
    """Largest lane-dense width (multiple of 128) dividing `total`, else pad."""
    for cand in (1024, 512, 256, 128):
        if total % cand == 0:
            return cand, False
    return 1024, True


def quantizer_forward(x, scale, bits_precision=8):
    """Fake-quantization forward pass.

    x:     float array of any shape (e.g. NCHW activations)
    scale: python float / 0-d array, the quantization step size
    """
    # Symmetric signed integer range from bits_precision (what a concrete
    # subclass like a SignedQuantizer would set as min_val / max_val).
    min_val = float(-(2 ** (bits_precision - 1)))
    max_val = float(2 ** (bits_precision - 1) - 1)

    orig_shape = x.shape
    total = int(x.size)

    lane, needs_pad = _choose_lane(total)

    xf = x.reshape(-1)
    if needs_pad:
        # Fallback only (total not divisible by 128): pad with zeros, which
        # quantize to 0 and are sliced off afterwards (never NaN/Inf).
        n_rows = -(-total // lane)
        xf = jnp.pad(xf, (0, n_rows * lane - total))
    else:
        n_rows = total // lane
    x2 = xf.reshape(n_rows, lane)

    # Block sizing: ~4 MiB blocks, but cap block_rows at ~n_rows/8 (rounded to
    # a multiple of 8) so the grid has ~8 steps for v7x's two TensorCores.
    target_rows = max(8, TARGET_BLOCK_BYTES // (lane * 4))
    cap_rows = max(8, ((-(-n_rows // 8) + 7) // 8) * 8)
    block_rows = min(target_rows, cap_rows)
    if block_rows >= n_rows:
        # Tiny tensor: single full-extent block (no 8-row alignment needed).
        block_rows = n_rows
        grid = (1,)
    else:
        block_rows = max(8, (block_rows // 8) * 8)
        grid = (-(-n_rows // block_rows),)  # partial last block handled by Pallas

    s0 = jnp.asarray(scale, dtype=jnp.float32).reshape(())
    scale_arr = jnp.stack([s0, jnp.float32(1.0) / s0])  # (2,) -> SMEM

    out2 = pl.pallas_call(
        _make_quantizer_kernel(min_val, max_val),
        out_shape=jax.ShapeDtypeStruct(x2.shape, x2.dtype),
        grid=grid,
        in_specs=[
            pl.BlockSpec(memory_space=pltpu.SMEM),                 # [scale, 1/scale]
            pl.BlockSpec((block_rows, lane), lambda i: (i, 0)),    # tiled slab
        ],
        out_specs=pl.BlockSpec((block_rows, lane), lambda i: (i, 0)),
        compiler_params=pltpu.CompilerParams(
            dimension_semantics=("parallel",),
            vmem_limit_bytes=VMEM_LIMIT_BYTES,
        ),
    )(scale_arr, x2)

    if needs_pad:
        return out2.reshape(-1)[:total].reshape(orig_shape)
    return out2.reshape(orig_shape)


def quantizer_reference(x, scale, bits_precision=8):
    """Pure-JAX reference matching the kernel's math (mul by reciprocal)."""
    min_val = float(-(2 ** (bits_precision - 1)))
    max_val = float(2 ** (bits_precision - 1) - 1)
    s = jnp.float32(scale)
    inv = jnp.float32(1.0) / s
    q = jnp.clip(jnp.round(x * inv), min_val, max_val)
    return q * s


def _check(x, scale, bits_precision=8):
    y = jax.block_until_ready(quantizer_forward(x, scale, bits_precision))
    y_ref = quantizer_reference(x, scale, bits_precision)
    assert y.shape == x.shape and y.dtype == x.dtype
    assert jnp.allclose(y, y_ref, atol=1e-6, rtol=1e-6)
    # Loose check vs. the PyTorch-style divide formulation (allows a single
    # quantization-step difference from a rounding-boundary ulp flip).
    lo = float(-(2 ** (bits_precision - 1)))
    hi = float(2 ** (bits_precision - 1) - 1)
    q_div = jnp.clip(jnp.round(x / scale), lo, hi) * scale
    assert jnp.max(jnp.abs(y - q_div)) <= scale + 1e-6


if __name__ == "__main__":
    key = jax.random.PRNGKey(0)
    bits_precision = 8
    # Deterministic buffer initialization (module registers scale=1.0,
    # zero_point=0.0; a calibrated scale would normally come from
    # range_tracker + update_params, which are abstract here).
    scale = 0.05

    # Small NCHW activation tensor (no-pad, single-block path).
    k0, k1, k2 = jax.random.split(key, 3)
    x = jax.random.normal(k0, (2, 4, 16, 16), dtype=jnp.float32)
    _check(x, scale, bits_precision)

    # Slightly larger activation exercising the multi-step grid path.
    x_big = jax.random.normal(k1, (4, 8, 32, 32), dtype=jnp.float32)
    _check(x_big, scale, bits_precision)

    # Odd size not divisible by 128: exercises the fallback pad path.
    x_odd = jax.random.normal(k2, (3, 5, 7, 7), dtype=jnp.float32)
    _check(x_odd, scale, bits_precision)

    print("KERNEL_OK")
</pallas_src>

<mosaic_0001>
module attributes {stable_mosaic.version = 11 : i64} {
  func.func @kernel(%arg0: i32, %arg1: memref<2xf32, #tpu.memory_space<smem>>, %arg2: memref<2x1024xf32, #tpu.memory_space<vmem>>, %arg3: memref<2x1024xf32, #tpu.memory_space<vmem>>) attributes {dimension_semantics = [#tpu.dimension_semantics<parallel>], iteration_bounds = array<i64: 1>, scalar_prefetch = 0 : i64, scratch_operands = 0 : i64, tpu.core_type = #tpu.core_type<tc>, window_params = [{transform_indices = @transform_0, window_bounds = array<i64: 2>}, {transform_indices = @transform_1, window_bounds = array<i64: 2, 1024>}, {transform_indices = @transform_2, window_bounds = array<i64: 2, 1024>}]} {
    %c0 = arith.constant 0 : index
    %0 = memref.load %arg1[%c0] : memref<2xf32, #tpu.memory_space<smem>>
    %c1 = arith.constant 1 : index
    %1 = memref.load %arg1[%c1] : memref<2xf32, #tpu.memory_space<smem>>
    %c0_0 = arith.constant 0 : index
    %c0_1 = arith.constant 0 : index
    %2 = vector.load %arg2[%c0_0, %c0_1] : memref<2x1024xf32, #tpu.memory_space<vmem>>, vector<2x1024xf32>
    %3 = vector.broadcast %1 : f32 to vector<2x1024xf32>
    %4 = arith.mulf %2, %3 : vector<2x1024xf32>
    %5 = math.roundeven %4 : vector<2x1024xf32>
    %cst = arith.constant -1.280000e+02 : f32
    %cst_2 = arith.constant 1.270000e+02 : f32
    %6 = vector.broadcast %cst : f32 to vector<2x1024xf32>
    %7 = arith.maximumf %6, %5 : vector<2x1024xf32>
    %8 = vector.broadcast %cst_2 : f32 to vector<2x1024xf32>
    %9 = arith.minimumf %8, %7 : vector<2x1024xf32>
    %10 = vector.broadcast %0 : f32 to vector<2x1024xf32>
    %11 = arith.mulf %9, %10 : vector<2x1024xf32>
    %c0_3 = arith.constant 0 : index
    %c0_4 = arith.constant 0 : index
    %12 = vector.load %arg3[%c0_3, %c0_4] : memref<2x1024xf32, #tpu.memory_space<vmem>>, vector<2x1024xf32>
    tpu.vector_store %arg3[%c0_3, %c0_4], %11 {strides = array<i32>} : memref<2x1024xf32, #tpu.memory_space<vmem>>, vector<2x1024xf32>,
    return
  }
  func.func @transform_0(%arg0: i32) -> i32 {
    %c0_i32 = arith.constant 0 : i32
    %c0_i32_0 = arith.constant 0 : i32
    return %c0_i32 : i32
  }
  func.func @transform_1(%arg0: i32) -> (i32, i32) {
    %c0_i32 = arith.constant 0 : i32
    %c0_i32_0 = arith.constant 0 : i32
    return %arg0, %c0_i32 : i32, i32
  }
  func.func @transform_2(%arg0: i32) -> (i32, i32) {
    %c0_i32 = arith.constant 0 : i32
    %c0_i32_0 = arith.constant 0 : i32
    return %arg0, %c0_i32 : i32, i32
  }
}

</mosaic_0001>

<llo_original>
// kernel: tpu_custom_call.1
$region0: #{tpu_custom_call.1}
  #allocation0 [shape = 'u32[]', space=smem, size = 0x4, offset = 0x4, fixed_abs, tag = 'smem constant byte address 0x4 - core index']
  #allocation1 [shape = 'u32[144,128]{1,0:T(1,128)}', space=vmem, size = 0x12000, scoped, tag = 'internal scratch']
  %s0 = inlined_call_operand.hbm [shape: f32[2], index: 0, kind: input, shape index: {}]
  %s1 = inlined_call_operand.hbm [shape: f32[2,1024], index: 1, kind: input, shape index: {}]
  %s2 = inlined_call_operand.hbm [shape: f32[2,1024], index: 2, kind: output, shape index: {}]
  %s3 = sld [smem:[#allocation0]]
  $region26: #{tpu_custom_call.1} parent=0
    _
  %s5 = ssub.s32 1, %s3
  %s6 = scalar_select 0, %s5, %s3
  $region1: #{tpu_custom_call.1} parent=0
    #allocation2 [shape = 'u8[512]{0}', space=smem, size = 0x200, scoped, tag = 'input window, operand 0, single buffered']
    #allocation3 [shape = 's32[1]{0}', space=sflag, size = 0x4, scoped, tag = 'scoped memory for tpu_custom_call.1']
    #allocation4 [shape = 's32[1]{0}', space=sflag, size = 0x4, scoped, tag = 'scoped memory for tpu_custom_call.1']
    #allocation5 [shape = 's32[1]{0}', space=sflag, size = 0x4, scoped, tag = 'scoped memory for tpu_custom_call.1']
    #allocation6 [shape = 'u8[8192]{0}', space=vmem, size = 0x2000, scoped, tag = 'input window, operand 1, single buffered']
    #allocation7 [shape = 'u8[8192]{0}', space=vmem, size = 0x2000, scoped, tag = 'output window, operand 0, single buffered']
    %7 = vsyncpa [#allocation5], 0
    %8 = vsyncpa [#allocation3], 0
    %9 = vsyncpa [#allocation4], 0
    // Predicated region
    $region2: #{tpu_custom_call.1} parent=1 // pred_check
      _
    $region3: #{tpu_custom_call.1} parent=1 // pred_check_branch
      %11 = sbr.rel (0) target = $region5
    $region4: #{tpu_custom_call.1} parent=1 // pred_region
      %s13 = ssub.s32 16, 16
      %14 = vsyncadd [#allocation5], %s13
      %17 = dma.hbm_to_smem %s0, 16, [#allocation2], [#allocation5]
    $region5: #{tpu_custom_call.1} parent=1 // pred_fallthru
      _
    // Predicated region
    $region6: #{tpu_custom_call.1} parent=1 // pred_check
      _
    $region7: #{tpu_custom_call.1} parent=1 // pred_check_branch
      %19 = sbr.rel (0) target = $region9
    $region8: #{tpu_custom_call.1} parent=1 // pred_region
      %s21 = ssub.s32 256, 256
      %22 = vsyncadd [#allocation3], %s21
      %s24 = sshll.u32 [#allocation6], 4
      %s25 = int_to_ptr.vmem [resolvable:$true] %s24
      %27 = dma.hbm_to_vmem [thread:$0]  %s1, 256, %s25, [#allocation3]
    $region9: #{tpu_custom_call.1} parent=1 // pred_fallthru
      _
    // Predicated region
    $region10: #{tpu_custom_call.1} parent=1 // pred_check
      _
    $region11: #{tpu_custom_call.1} parent=1 // pred_check_branch
      %29 = sbr.rel (0) target = $region13
    $region12: #{tpu_custom_call.1} parent=1 // pred_region
      %30 = dma.done [#allocation5], 16
    $region13: #{tpu_custom_call.1} parent=1 // pred_fallthru
      _
    // Predicated region
    $region14: #{tpu_custom_call.1} parent=1 // pred_check
      _
    $region15: #{tpu_custom_call.1} parent=1 // pred_check_branch
      %32 = sbr.rel (0) target = $region17
    $region16: #{tpu_custom_call.1} parent=1 // pred_region
      %33 = dma.done [#allocation3], 256
    $region17: #{tpu_custom_call.1} parent=1 // pred_fallthru
      _
    %34 = sfence
    %s35 = sld [smem:[#allocation2]]
    %s36 = sld [smem:[#allocation2 + $0x1]]
    %v37 = vld [vmem:[#allocation6] sm:$0xff]
    %v38 = vld [vmem:[#allocation6 + $0x8] sm:$0xff]
    %v39 = vstv %s36
    %v40 = vmul.f32 %v37, %v39
    %v41 = vmul.f32 %v38, %v39
    %v42 = vround.ne.pseudo %v40
    %v43 = vround.ne.pseudo %v41
    %v44 = vmax.f32 %v42, -128.0
    %v45 = vmax.f32 %v43, -128.0
    %v46 = vmin.f32 %v44, 127.0
    %v47 = vmin.f32 %v45, 127.0
    %v48 = vstv %s35
    %v49 = vmul.f32 %v46, %v48
    %v50 = vmul.f32 %v47, %v48
    %51 = vst [vmem:[#allocation7] sm:$0xff] %v49
    %52 = vst [vmem:[#allocation7 + $0x8] sm:$0xff] %v50
    // Predicated region
    $region18: #{tpu_custom_call.1} parent=1 // pred_check
      _
    $region19: #{tpu_custom_call.1} parent=1 // pred_check_branch
      %54 = sbr.rel (0) target = $region21
    $region20: #{tpu_custom_call.1} parent=1 // pred_region
      %s56 = ssub.s32 256, 256
      %57 = vsyncadd [#allocation4], %s56
      %s59 = sshll.u32 [#allocation7], 4
      %s60 = int_to_ptr.vmem [resolvable:$true] %s59
      %62 = dma.vmem_to_hbm [thread:$0]  %s60, 256, %s2, [#allocation4]
    $region21: #{tpu_custom_call.1} parent=1 // pred_fallthru
      _
    // Predicated region
    $region22: #{tpu_custom_call.1} parent=1 // pred_check
      _
    $region23: #{tpu_custom_call.1} parent=1 // pred_check_branch
      %64 = sbr.rel (0) target = $region25
    $region24: #{tpu_custom_call.1} parent=1 // pred_region
      %65 = dma.done [#allocation4], 256
    $region25: #{tpu_custom_call.1} parent=1 // pred_fallthru
      _
    %66 = vsyncpa [#allocation3], 1
    %67 = vsyncpa [#allocation4], 1
    %68 = vsyncpa [#allocation5], 1

</llo_original>
